<compile_context>
chip_gen: v5e
topology: v5e:2x2
jax: 0.10.0
libtpu: 0.0.40
codegen_flags: <defaults>
</compile_context>

<pallas_src>
import math

import jax
import jax.numpy as jnp
from jax import lax
from jax.experimental import pallas as pl
from jax.experimental.pallas import tpu as pltpu


_INV_SQRT2 = 1.0 / math.sqrt(2.0)


def _gelu_exact(x):
    # nn.GELU() default = exact erf formulation.
    return 0.5 * x * (1.0 + lax.erf(x * _INV_SQRT2))


def _mlp_kernel(t_ref, at_ref, w1a_ref, w1t_ref, b1_ref,
                w2_ref, b2_ref, w3_ref, b3_ref, ot_ref):
    # Everything is transposed: activations are (features, batch_tile), so the
    # batch tile sits on the lane axis (lane-dense GELUs and stores).

    # Fold the time scalar into the first-layer bias (replaces the concat).
    t = t_ref[0]                                   # SMEM scalar
    b1_eff = b1_ref[...] + t * w1t_ref[...]        # (hidden, 1)

    # Linear(dim -> hidden) on the `a` part of W1, + folded bias, + GELU.
    h1 = jnp.dot(w1a_ref[...], at_ref[...],
                 preferred_element_type=jnp.float32) + b1_eff
    h1 = _gelu_exact(h1)                           # (hidden, tb)
    # TODO(synk): Dropout(0.1) is identity in eval mode; training-mode dropout not implemented.

    # Linear(hidden -> hidden//2) + GELU.
    h2 = jnp.dot(w2_ref[...], h1,
                 preferred_element_type=jnp.float32) + b2_ref[...]
    h2 = _gelu_exact(h2)                           # (hidden//2, tb)

    # Linear(hidden//2 -> dim).
    out = jnp.dot(w3_ref[...], h2,
                  preferred_element_type=jnp.float32) + b3_ref[...]
    ot_ref[...] = out.astype(ot_ref.dtype)         # (dim, tb), lane-dense store


def _cdiv(a, b):
    return -(-a // b)


def _round_up(x, m):
    return ((x + m - 1) // m) * m


def attention_ode_forward(t, a, params, *, batch_tile=2048):
    """t: scalar (or shape-(1,)) array, a: (B, dim). Returns (B, dim)."""
    B, dim = a.shape
    w1, b1, w2, b2, w3, b3 = params
    hidden = w1.shape[1]
    hidden2 = w2.shape[1]

    # Pre-transpose the tiny weights/biases once (weights only, one-off cost).
    # Rows 0..dim-1 of W1 act on `a`; the last row multiplies the time scalar
    # (folded into b1 inside the kernel).
    w1a_t = jnp.transpose(w1[:dim, :])             # (hidden, dim)
    w1t_t = jnp.transpose(w1[dim:dim + 1, :])      # (hidden, 1)
    b1_t = jnp.reshape(b1, (1, hidden)).T          # (hidden, 1)
    w2_t = jnp.transpose(w2)                       # (hidden2, hidden)
    b2_t = jnp.reshape(b2, (1, hidden2)).T         # (hidden2, 1)
    w3_t = jnp.transpose(w3)                       # (dim, hidden2)
    b3_t = jnp.reshape(b3, (1, dim)).T             # (dim, 1)

    t_arr = jnp.reshape(t, (1,)).astype(jnp.float32)

    # Batch tiling.  Batch sits on the lane axis -> tiles must be 128-aligned.
    LANE = 128
    n_steps = _cdiv(B, batch_tile)
    if n_steps == 1 and B > 2 * LANE:
        n_steps = 2          # >=2 grid steps so v7x's second TensorCore gets work
    tb = _round_up(_cdiv(B, n_steps), LANE)
    Bp = n_steps * tb

    # Layout plumbing: present the batch on the lane axis.
    a_t = jnp.transpose(a)                         # (dim, B)
    if Bp != B:
        a_t = jnp.pad(a_t, ((0, 0), (0, Bp - B)))

    def const(shape):
        # Weight/bias blocks: whole array, same block every grid step ->
        # resident in VMEM; the pipeline's revisit optimization skips re-DMA.
        return pl.BlockSpec(shape, lambda i: (0, 0))

    out_t = pl.pallas_call(
        _mlp_kernel,
        out_shape=jax.ShapeDtypeStruct((dim, Bp), a.dtype),
        grid=(n_steps,),
        in_specs=[
            pl.BlockSpec((1,), lambda i: (0,),
                         memory_space=pltpu.MemorySpace.SMEM),   # t
            pl.BlockSpec((dim, tb), lambda i: (0, i)),           # a^T tile
            const((hidden, dim)),                                # W1[:dim]^T
            const((hidden, 1)),                                  # W1[dim]^T
            const((hidden, 1)),                                  # b1^T
            const((hidden2, hidden)),                            # W2^T
            const((hidden2, 1)),                                 # b2^T
            const((dim, hidden2)),                               # W3^T
            const((dim, 1)),                                     # b3^T
        ],
        out_specs=pl.BlockSpec((dim, tb), lambda i: (0, i)),     # out^T tile
        compiler_params=pltpu.CompilerParams(
            dimension_semantics=("parallel",)),
    )(t_arr, a_t, w1a_t, w1t_t, b1_t, w2_t, b2_t, w3_t, b3_t)

    out = jnp.transpose(out_t)                     # (Bp, dim)
    return out[:B] if Bp != B else out


def init_params(key, dim, hidden):
    """Deterministic init mimicking PyTorch nn.Linear (uniform +/- 1/sqrt(fan_in))."""
    def linear(key, fan_in, fan_out):
        kw, kb = jax.random.split(key)
        bound = 1.0 / math.sqrt(fan_in)
        w = jax.random.uniform(kw, (fan_in, fan_out), jnp.float32, -bound, bound)
        b = jax.random.uniform(kb, (1, fan_out), jnp.float32, -bound, bound)
        return w, b

    k1, k2, k3 = jax.random.split(key, 3)
    w1, b1 = linear(k1, dim + 1, hidden)
    w2, b2 = linear(k2, hidden, hidden // 2)
    w3, b3 = linear(k3, hidden // 2, dim)
    return (w1, b1, w2, b2, w3, b3)


def reference_forward(t, a, params):
    """Pure-JAX reference (mirrors the PyTorch module exactly)."""
    w1, b1, w2, b2, w3, b3 = params
    B = a.shape[0]
    tvec = jnp.broadcast_to(jnp.reshape(t, (1, 1)).astype(a.dtype), (B, 1))
    x = jnp.concatenate([a, tvec], axis=1)
    h1 = _gelu_exact(x @ w1 + b1)
    h2 = _gelu_exact(h1 @ w2 + b2)
    return h2 @ w3 + b3


if __name__ == "__main__":
    dim, hidden, batch = 16, 32, 8

    key = jax.random.PRNGKey(0)
    k_params, k_a, k_t = jax.random.split(key, 3)

    params = init_params(k_params, dim, hidden)
    a = jax.random.normal(k_a, (batch, dim), jnp.float32)
    t = jax.random.uniform(k_t, (1,), jnp.float32)

    out = attention_ode_forward(t, a, params)
    out = jax.block_until_ready(out)

    ref = reference_forward(t, a, params)
    assert out.shape == (batch, dim)
    assert jnp.allclose(out, ref, atol=1e-5, rtol=1e-5), "mismatch vs pure-JAX reference"

    print("KERNEL_OK")
</pallas_src>

<mosaic_0001>
module attributes {stable_mosaic.version = 11 : i64} {
  func.func @_mlp_kernel(%arg0: i32, %arg1: memref<1xf32, #tpu.memory_space<smem>>, %arg2: memref<16x128xf32, #tpu.memory_space<vmem>>, %arg3: memref<32x16xf32, #tpu.memory_space<vmem>>, %arg4: memref<32x1xf32, #tpu.memory_space<vmem>>, %arg5: memref<32x1xf32, #tpu.memory_space<vmem>>, %arg6: memref<16x32xf32, #tpu.memory_space<vmem>>, %arg7: memref<16x1xf32, #tpu.memory_space<vmem>>, %arg8: memref<16x16xf32, #tpu.memory_space<vmem>>, %arg9: memref<16x1xf32, #tpu.memory_space<vmem>>, %arg10: memref<16x128xf32, #tpu.memory_space<vmem>>) attributes {dimension_semantics = [#tpu.dimension_semantics<parallel>], iteration_bounds = array<i64: 1>, scalar_prefetch = 0 : i64, scratch_operands = 0 : i64, tpu.core_type = #tpu.core_type<tc>, window_params = [{transform_indices = @transform_0, window_bounds = array<i64: 1>}, {transform_indices = @transform_1, window_bounds = array<i64: 16, 128>}, {pipeline_mode = #tpu.pipeline_mode<synchronous>, transform_indices = @transform_2, window_bounds = array<i64: 32, 16>}, {pipeline_mode = #tpu.pipeline_mode<synchronous>, transform_indices = @transform_3, window_bounds = array<i64: 32, 1>}, {pipeline_mode = #tpu.pipeline_mode<synchronous>, transform_indices = @transform_4, window_bounds = array<i64: 32, 1>}, {pipeline_mode = #tpu.pipeline_mode<synchronous>, transform_indices = @transform_5, window_bounds = array<i64: 16, 32>}, {pipeline_mode = #tpu.pipeline_mode<synchronous>, transform_indices = @transform_6, window_bounds = array<i64: 16, 1>}, {pipeline_mode = #tpu.pipeline_mode<synchronous>, transform_indices = @transform_7, window_bounds = array<i64: 16, 16>}, {pipeline_mode = #tpu.pipeline_mode<synchronous>, transform_indices = @transform_8, window_bounds = array<i64: 16, 1>}, {transform_indices = @transform_9, window_bounds = array<i64: 16, 128>}]} {
    %c0 = arith.constant 0 : index
    %0 = memref.load %arg1[%c0] : memref<1xf32, #tpu.memory_space<smem>>
    %c0_0 = arith.constant 0 : index
    %c0_1 = arith.constant 0 : index
    %1 = vector.load %arg5[%c0_0, %c0_1] : memref<32x1xf32, #tpu.memory_space<vmem>>, vector<32x1xf32>
    %c0_2 = arith.constant 0 : index
    %c0_3 = arith.constant 0 : index
    %2 = vector.load %arg4[%c0_2, %c0_3] : memref<32x1xf32, #tpu.memory_space<vmem>>, vector<32x1xf32>
    %3 = vector.broadcast %0 : f32 to vector<32x1xf32>
    %4 = arith.mulf %3, %2 : vector<32x1xf32>
    %5 = arith.addf %1, %4 : vector<32x1xf32>
    %c0_4 = arith.constant 0 : index
    %c0_5 = arith.constant 0 : index
    %6 = vector.load %arg3[%c0_4, %c0_5] : memref<32x16xf32, #tpu.memory_space<vmem>>, vector<32x16xf32>
    %c0_6 = arith.constant 0 : index
    %c0_7 = arith.constant 0 : index
    %7 = vector.load %arg2[%c0_6, %c0_7] : memref<16x128xf32, #tpu.memory_space<vmem>>, vector<16x128xf32>
    %cst = arith.constant dense<0.000000e+00> : vector<32x128xf32>
    %8 = tpu.matmul %6, %7, %cst {dimension_numbers = #tpu.dot_dimension_numbers<[1], [0], [0], [1], [0, 0, 1, 1], [], []>} : vector<32x16xf32>, vector<16x128xf32>, vector<32x128xf32> -> vector<32x128xf32>
    %9 = vector.broadcast %5 : vector<32x1xf32> to vector<32x128xf32>
    %10 = arith.addf %8, %9 : vector<32x128xf32>
    %cst_8 = arith.constant 5.000000e-01 : f32
    %11 = vector.broadcast %cst_8 : f32 to vector<32x128xf32>
    %12 = arith.mulf %11, %10 : vector<32x128xf32>
    %cst_9 = arith.constant 0.707106769 : f32
    %13 = vector.broadcast %cst_9 : f32 to vector<32x128xf32>
    %14 = arith.mulf %10, %13 : vector<32x128xf32>
    %15 = math.erf %14 : vector<32x128xf32>
    %cst_10 = arith.constant 1.000000e+00 : f32
    %16 = vector.broadcast %cst_10 : f32 to vector<32x128xf32>
    %17 = arith.addf %16, %15 : vector<32x128xf32>
    %18 = arith.mulf %12, %17 : vector<32x128xf32>
    %c0_11 = arith.constant 0 : index
    %c0_12 = arith.constant 0 : index
    %19 = vector.load %arg6[%c0_11, %c0_12] : memref<16x32xf32, #tpu.memory_space<vmem>>, vector<16x32xf32>
    %cst_13 = arith.constant dense<0.000000e+00> : vector<16x128xf32>
    %20 = tpu.matmul %19, %18, %cst_13 {dimension_numbers = #tpu.dot_dimension_numbers<[1], [0], [0], [1], [0, 0, 1, 1], [], []>} : vector<16x32xf32>, vector<32x128xf32>, vector<16x128xf32> -> vector<16x128xf32>
    %c0_14 = arith.constant 0 : index
    %c0_15 = arith.constant 0 : index
    %21 = vector.load %arg7[%c0_14, %c0_15] : memref<16x1xf32, #tpu.memory_space<vmem>>, vector<16x1xf32>
    %22 = vector.broadcast %21 : vector<16x1xf32> to vector<16x128xf32>
    %23 = arith.addf %20, %22 : vector<16x128xf32>
    %cst_16 = arith.constant 5.000000e-01 : f32
    %24 = vector.broadcast %cst_16 : f32 to vector<16x128xf32>
    %25 = arith.mulf %24, %23 : vector<16x128xf32>
    %cst_17 = arith.constant 0.707106769 : f32
    %26 = vector.broadcast %cst_17 : f32 to vector<16x128xf32>
    %27 = arith.mulf %23, %26 : vector<16x128xf32>
    %28 = math.erf %27 : vector<16x128xf32>
    %cst_18 = arith.constant 1.000000e+00 : f32
    %29 = vector.broadcast %cst_18 : f32 to vector<16x128xf32>
    %30 = arith.addf %29, %28 : vector<16x128xf32>
    %31 = arith.mulf %25, %30 : vector<16x128xf32>
    %c0_19 = arith.constant 0 : index
    %c0_20 = arith.constant 0 : index
    %32 = vector.load %arg8[%c0_19, %c0_20] : memref<16x16xf32, #tpu.memory_space<vmem>>, vector<16x16xf32>
    %cst_21 = arith.constant dense<0.000000e+00> : vector<16x128xf32>
    %33 = tpu.matmul %32, %31, %cst_21 {dimension_numbers = #tpu.dot_dimension_numbers<[1], [0], [0], [1], [0, 0, 1, 1], [], []>} : vector<16x16xf32>, vector<16x128xf32>, vector<16x128xf32> -> vector<16x128xf32>
    %c0_22 = arith.constant 0 : index
    %c0_23 = arith.constant 0 : index
    %34 = vector.load %arg9[%c0_22, %c0_23] : memref<16x1xf32, #tpu.memory_space<vmem>>, vector<16x1xf32>
    %35 = vector.broadcast %34 : vector<16x1xf32> to vector<16x128xf32>
    %36 = arith.addf %33, %35 : vector<16x128xf32>
    %c0_24 = arith.constant 0 : index
    %c0_25 = arith.constant 0 : index
    %37 = vector.load %arg10[%c0_24, %c0_25] : memref<16x128xf32, #tpu.memory_space<vmem>>, vector<16x128xf32>
    tpu.vector_store %arg10[%c0_24, %c0_25], %36 {strides = array<i32>} : memref<16x128xf32, #tpu.memory_space<vmem>>, vector<16x128xf32>,
    return
  }
  func.func @transform_0(%arg0: i32) -> i32 {
    %c0_i32 = arith.constant 0 : i32
    %c0_i32_0 = arith.constant 0 : i32
    return %c0_i32 : i32
  }
  func.func @transform_1(%arg0: i32) -> (i32, i32) {
    %c0_i32 = arith.constant 0 : i32
    %c0_i32_0 = arith.constant 0 : i32
    return %c0_i32, %arg0 : i32, i32
  }
  func.func @transform_2(%arg0: i32) -> (i32, i32) {
    %c0_i32 = arith.constant 0 : i32
    %c0_i32_0 = arith.constant 0 : i32
    %c0_i32_1 = arith.constant 0 : i32
    return %c0_i32, %c0_i32_0 : i32, i32
  }
  func.func @transform_3(%arg0: i32) -> (i32, i32) {
    %c0_i32 = arith.constant 0 : i32
    %c0_i32_0 = arith.constant 0 : i32
    %c0_i32_1 = arith.constant 0 : i32
    return %c0_i32, %c0_i32_0 : i32, i32
  }
  func.func @transform_4(%arg0: i32) -> (i32, i32) {
    %c0_i32 = arith.constant 0 : i32
    %c0_i32_0 = arith.constant 0 : i32
    %c0_i32_1 = arith.constant 0 : i32
    return %c0_i32, %c0_i32_0 : i32, i32
  }
  func.func @transform_5(%arg0: i32) -> (i32, i32) {
    %c0_i32 = arith.constant 0 : i32
    %c0_i32_0 = arith.constant 0 : i32
    %c0_i32_1 = arith.constant 0 : i32
    return %c0_i32, %c0_i32_0 : i32, i32
  }
  func.func @transform_6(%arg0: i32) -> (i32, i32) {
    %c0_i32 = arith.constant 0 : i32
    %c0_i32_0 = arith.constant 0 : i32
    %c0_i32_1 = arith.constant 0 : i32
    return %c0_i32, %c0_i32_0 : i32, i32
  }
  func.func @transform_7(%arg0: i32) -> (i32, i32) {
    %c0_i32 = arith.constant 0 : i32
    %c0_i32_0 = arith.constant 0 : i32
    %c0_i32_1 = arith.constant 0 : i32
    return %c0_i32, %c0_i32_0 : i32, i32
  }
  func.func @transform_8(%arg0: i32) -> (i32, i32) {
    %c0_i32 = arith.constant 0 : i32
    %c0_i32_0 = arith.constant 0 : i32
    %c0_i32_1 = arith.constant 0 : i32
    return %c0_i32, %c0_i32_0 : i32, i32
  }
  func.func @transform_9(%arg0: i32) -> (i32, i32) {
    %c0_i32 = arith.constant 0 : i32
    %c0_i32_0 = arith.constant 0 : i32
    return %c0_i32, %arg0 : i32, i32
  }
}

</mosaic_0001>

<llo_original>
// kernel: tpu_custom_call.1
$region0: #{tpu_custom_call.1}
  #allocation0 [shape = 'u32[]', space=smem, size = 0x4, offset = 0x4, fixed_abs, tag = 'smem constant byte address 0x4 - core index']
  #allocation1 [shape = 'u32[72,128]{1,0:T(1,128)}', space=vmem, size = 0x9000, scoped, tag = 'internal scratch']
  #allocation2 [shape = 'f32[1]{0:T(128)S(6)}', space=smem, size = 0x200, scoped, tag = 'scoped memory for tpu_custom_call.1']
  %s0 = inlined_call_operand.<no memory space> [shape: f32[1], index: 0, kind: input, shape index: {}]
  %s1 = inlined_call_operand.vmem [shape: f32[16,128], index: 1, kind: input, shape index: {}]
  %s2 = inlined_call_operand.vmem [shape: f32[32,16], index: 2, kind: input, shape index: {}]
  %s3 = inlined_call_operand.vmem [shape: f32[32,1], index: 3, kind: input, shape index: {}]
  %s4 = inlined_call_operand.vmem [shape: f32[32,1], index: 4, kind: input, shape index: {}]
  %s5 = inlined_call_operand.vmem [shape: f32[16,32], index: 5, kind: input, shape index: {}]
  %s6 = inlined_call_operand.vmem [shape: f32[16,1], index: 6, kind: input, shape index: {}]
  %s7 = inlined_call_operand.vmem [shape: f32[16,16], index: 7, kind: input, shape index: {}]
  %s8 = inlined_call_operand.vmem [shape: f32[16,1], index: 8, kind: input, shape index: {}]
  %s9 = inlined_call_operand.hbm [shape: f32[16,128], index: 9, kind: output, shape index: {}]
  %s10 = sld [smem:[#allocation0]]
  $region46: #{tpu_custom_call.1} parent=0
    _
  %s12 = ssub.s32 1, %s10
  %s13 = scalar_select 0, %s12, %s10
  %14 = sst [smem:[#allocation2]] %s0
  $region1: #{tpu_custom_call.1} parent=0
    #allocation3 [shape = 'u8[8192]{0}', space=vmem, size = 0x2000, scoped, tag = 'output window, operand 0, single buffered']
    #allocation4 [shape = 's32[1]{0}', space=sflag, size = 0x4, scoped, tag = 'scoped memory for tpu_custom_call.1']
    %15 = vsyncpa [#allocation4], 0
    // Predicated region
    $region2: #{tpu_custom_call.1} parent=1 // pred_check
      _
    $region3: #{tpu_custom_call.1} parent=1 // pred_check_branch
      %17 = sbr.rel (0) target = $region5
    $region4: #{tpu_custom_call.1} parent=1 // pred_region
      _
    $region5: #{tpu_custom_call.1} parent=1 // pred_fallthru
      _
    // Predicated region
    $region6: #{tpu_custom_call.1} parent=1 // pred_check
      _
    $region7: #{tpu_custom_call.1} parent=1 // pred_check_branch
      %19 = sbr.rel (0) target = $region9
    $region8: #{tpu_custom_call.1} parent=1 // pred_region
      _
    $region9: #{tpu_custom_call.1} parent=1 // pred_fallthru
      _
    // Predicated region
    $region10: #{tpu_custom_call.1} parent=1 // pred_check
      _
    $region11: #{tpu_custom_call.1} parent=1 // pred_check_branch
      %21 = sbr.rel (0) target = $region13
    $region12: #{tpu_custom_call.1} parent=1 // pred_region
      _
    $region13: #{tpu_custom_call.1} parent=1 // pred_fallthru
      _
    // Predicated region
    $region14: #{tpu_custom_call.1} parent=1 // pred_check
      _
    $region15: #{tpu_custom_call.1} parent=1 // pred_check_branch
      %23 = sbr.rel (0) target = $region17
    $region16: #{tpu_custom_call.1} parent=1 // pred_region
      _
    $region17: #{tpu_custom_call.1} parent=1 // pred_fallthru
      _
    // Predicated region
    $region18: #{tpu_custom_call.1} parent=1 // pred_check
      _
    $region19: #{tpu_custom_call.1} parent=1 // pred_check_branch
      %25 = sbr.rel (0) target = $region21
    $region20: #{tpu_custom_call.1} parent=1 // pred_region
      _
    $region21: #{tpu_custom_call.1} parent=1 // pred_fallthru
      _
    // Predicated region
    $region22: #{tpu_custom_call.1} parent=1 // pred_check
      _
    $region23: #{tpu_custom_call.1} parent=1 // pred_check_branch
      %27 = sbr.rel (0) target = $region25
    $region24: #{tpu_custom_call.1} parent=1 // pred_region
      _
    $region25: #{tpu_custom_call.1} parent=1 // pred_fallthru
      _
    // Predicated region
    $region26: #{tpu_custom_call.1} parent=1 // pred_check
      _
    $region27: #{tpu_custom_call.1} parent=1 // pred_check_branch
      %29 = sbr.rel (0) target = $region29
    $region28: #{tpu_custom_call.1} parent=1 // pred_region
      _
    $region29: #{tpu_custom_call.1} parent=1 // pred_fallthru
      _
    // Predicated region
    $region30: #{tpu_custom_call.1} parent=1 // pred_check
      _
    $region31: #{tpu_custom_call.1} parent=1 // pred_check_branch
      %31 = sbr.rel (0) target = $region33
    $region32: #{tpu_custom_call.1} parent=1 // pred_region
      _
    $region33: #{tpu_custom_call.1} parent=1 // pred_fallthru
      _
    // Predicated region
    $region34: #{tpu_custom_call.1} parent=1 // pred_check
      _
    $region35: #{tpu_custom_call.1} parent=1 // pred_check_branch
      %33 = sbr.rel (0) target = $region37
    $region36: #{tpu_custom_call.1} parent=1 // pred_region
      _
    $region37: #{tpu_custom_call.1} parent=1 // pred_fallthru
      _
    %s34 = sld [smem:[#allocation2]]
    %v35 = vld [vmem:[%s4] sm:$0xff]
    %v36 = vld [vmem:[%s4 + $0x8] sm:$0xff]
    %v37 = vld [vmem:[%s4 + $0x10] sm:$0xff]
    %v38 = vld [vmem:[%s4 + $0x18] sm:$0xff]
    %v39 = vld [vmem:[%s3] sm:$0xff]
    %v40 = vld [vmem:[%s3 + $0x8] sm:$0xff]
    %v41 = vld [vmem:[%s3 + $0x10] sm:$0xff]
    %v42 = vld [vmem:[%s3 + $0x18] sm:$0xff]
    %v43 = vstv %s34
    %v44 = vmul.f32 %v43, %v39
    %v45 = vmul.f32 %v43, %v40
    %v46 = vmul.f32 %v43, %v41
    %v47 = vmul.f32 %v43, %v42
    %v48 = vadd.f32 %v35, %v44
    %v49 = vadd.f32 %v36, %v45
    %v50 = vadd.f32 %v37, %v46
    %v51 = vadd.f32 %v38, %v47
    %v52 = vld [vmem:[%s2] sm:$0xff]
    %v53 = vld [vmem:[%s2 + $0x8] sm:$0xff]
    %v54 = vld [vmem:[%s2 + $0x10] sm:$0xff]
    %v55 = vld [vmem:[%s2 + $0x18] sm:$0xff]
    %v56 = vld [vmem:[%s1] sm:$0xff]
    %v57 = vld [vmem:[%s1 + $0x8] sm:$0xff]
    %59 = vset.pattern.permute.xlu0 0
    %60 = vperm.xlu0 %59, %v48
    %v61 = vpop.permute.xlu0 %60
    %64 = vset.pattern.permute.xlu0 0
    %65 = vperm.xlu0 %64, %v49
    %v66 = vpop.permute.xlu0 %65
    %69 = vset.pattern.permute.xlu0 0
    %70 = vperm.xlu0 %69, %v50
    %v71 = vpop.permute.xlu0 %70
    %74 = vset.pattern.permute.xlu0 0
    %75 = vperm.xlu0 %74, %v51
    %v76 = vpop.permute.xlu0 %75
    %vm78 = vcmask 130048
    %v80 = vsel %vm78, %v52, 0
    %v83 = vsel %vm78, %v53, 0
    %v86 = vsel %vm78, %v54, 0
    %v89 = vsel %vm78, %v55, 0
    %91 = vmatpush.msra.mxu0 0.0
    %92 = vmatpush.msra.mxu0 0.0
    %93 = vmatpush.msra.mxu0 0.0
    %94 = vmatpush.msra.mxu0 0.0
    %95 = vmatpush.msra.mxu0 0.0
    %96 = vmatpush.msra.mxu0 0.0
    %97 = vmatpush.msra.mxu0 0.0
    %98 = vmatpush.msra.mxu0 0.0
    %99 = vmatpush.msra.mxu0 0.0
    %100 = vmatpush.msra.mxu0 0.0
    %101 = vmatpush.msra.mxu0 0.0
    %102 = vmatpush.msra.mxu0 0.0
    %103 = vmatpush.msra.mxu0 0.0
    %104 = vmatpush.msra.mxu0 0.0
    %105 = vmatpush.msra.mxu0 %v57
    %106 = vmatpush.msra.mxu0 %v56
    %107 = vmatmul.f32.gmra.mxu0 %v80
    %v108 = vpop.f32.mrf.mxu0
    %v109 = vadd.f32 %v61, %v108
    %110 = vmatmul.f32.gmra.mxu0 %v83
    %v111 = vpop.f32.mrf.mxu0
    %v112 = vadd.f32 %v66, %v111
    %113 = vmatmul.f32.gmra.mxu0 %v86
    %v114 = vpop.f32.mrf.mxu0
    %v115 = vadd.f32 %v71, %v114
    %116 = vmatmul.f32.gmra.mxu0 %v89
    %v117 = vpop.f32.mrf.mxu0
    %v118 = vadd.f32 %v76, %v117
    %119 = vdwg.mxu0
    %v120 = vmul.f32 %v109, 0.5
    %v121 = vmul.f32 %v112, 0.5
    %v122 = vmul.f32 %v115, 0.5
    %v123 = vmul.f32 %v118, 0.5
    %v124 = vmul.f32 %v109, 0.70710677
    %v125 = vmul.f32 %v112, 0.70710677
    %v126 = vmul.f32 %v115, 0.70710677
    %v127 = vmul.f32 %v118, 0.70710677
    %v128 = vmul.f32 %v124, %v124
    %v129 = vmin.f32 16.0, %v128
    %v130 = vmul.f32 %v129, 2.1237322e-06
    %v131 = vadd.f32 %v130, 0.00028619796
    %v132 = vmul.f32 %v129, %v131
    %v133 = vadd.f32 %v132, 0.0036580483
    %v134 = vmul.f32 %v129, %v133
    %v135 = vadd.f32 %v134, 0.05243302
    %v136 = vmul.f32 %v129, %v135
    %v137 = vadd.f32 %v136, 0.18741608
    %v138 = vmul.f32 %v129, %v137
    %v139 = vadd.f32 %v138, 1.1283791
    %v140 = vmul.f32 %v124, %v139
    %v141 = vmul.f32 %v129, 3.8918573e-05
    %v142 = vadd.f32 %v141, 0.001143296
    %v143 = vmul.f32 %v129, %v142
    %v144 = vadd.f32 %v143, 0.014752088
    %v145 = vmul.f32 %v129, %v144
    %v146 = vadd.f32 %v145, 0.112945676
    %v147 = vmul.f32 %v129, %v146
    %v148 = vadd.f32 %v147, 0.4994258
    %v149 = vmul.f32 %v129, %v148
    %v150 = vadd.f32 %v149, 1.0
    %v151 = vrcp.pop %v150
    %v152 = vmul.f32 %v150, %v151
    %v153 = vsub.f32 1.0, %v152
    %v154 = vmul.f32 %v151, %v153
    %v155 = vadd.f32 %v151, %v154
    %vm156 = vweird.f32 %v150
    %vm157 = vweird.f32 %v151
    %vm158 = vmor %vm156, %vm157
    %v159 = vsel %vm158, %v151, %v155
    %v160 = vand.u32 2147483647, %v150
    %vm161 = vcmp.eq.f32.partialorder %v160, 8.507059e+37
    %v162 = vand.u32 %v150, 2147483648
    %v163 = vor.u32 1.1754944e-38, %v162
    %v164 = vsel %vm161, %v163, %v159
    %v165 = vmul.f32 %v140, %v164
    %v166 = vmin.f32 %v165, 1.0
    %v167 = vmax.f32 %v166, -1.0
    %v168 = vmul.f32 %v125, %v125
    %v169 = vmin.f32 16.0, %v168
    %v170 = vmul.f32 %v169, 2.1237322e-06
    %v171 = vadd.f32 %v170, 0.00028619796
    %v172 = vmul.f32 %v169, %v171
    %v173 = vadd.f32 %v172, 0.0036580483
    %v174 = vmul.f32 %v169, %v173
    %v175 = vadd.f32 %v174, 0.05243302
    %v176 = vmul.f32 %v169, %v175
    %v177 = vadd.f32 %v176, 0.18741608
    %v178 = vmul.f32 %v169, %v177
    %v179 = vadd.f32 %v178, 1.1283791
    %v180 = vmul.f32 %v125, %v179
    %v181 = vmul.f32 %v169, 3.8918573e-05
    %v182 = vadd.f32 %v181, 0.001143296
    %v183 = vmul.f32 %v169, %v182
    %v184 = vadd.f32 %v183, 0.014752088
    %v185 = vmul.f32 %v169, %v184
    %v186 = vadd.f32 %v185, 0.112945676
    %v187 = vmul.f32 %v169, %v186
    %v188 = vadd.f32 %v187, 0.4994258
    %v189 = vmul.f32 %v169, %v188
    %v190 = vadd.f32 %v189, 1.0
    %v191 = vrcp.pop %v190
    %v192 = vmul.f32 %v190, %v191
    %v193 = vsub.f32 1.0, %v192
    %v194 = vmul.f32 %v191, %v193
    %v195 = vadd.f32 %v191, %v194
    %vm196 = vweird.f32 %v190
    %vm197 = vweird.f32 %v191
    %vm198 = vmor %vm196, %vm197
    %v199 = vsel %vm198, %v191, %v195
    %v200 = vand.u32 2147483647, %v190
    %vm201 = vcmp.eq.f32.partialorder %v200, 8.507059e+37
    %v202 = vand.u32 %v190, 2147483648
    %v203 = vor.u32 1.1754944e-38, %v202
    %v204 = vsel %vm201, %v203, %v199
    %v205 = vmul.f32 %v180, %v204
    %v206 = vmin.f32 %v205, 1.0
    %v207 = vmax.f32 %v206, -1.0
    %v208 = vmul.f32 %v126, %v126
    %v209 = vmin.f32 16.0, %v208
    %v210 = vmul.f32 %v209, 2.1237322e-06
    %v211 = vadd.f32 %v210, 0.00028619796
    %v212 = vmul.f32 %v209, %v211
    %v213 = vadd.f32 %v212, 0.0036580483
    %v214 = vmul.f32 %v209, %v213
    %v215 = vadd.f32 %v214, 0.05243302
    %v216 = vmul.f32 %v209, %v215
    %v217 = vadd.f32 %v216, 0.18741608
    %v218 = vmul.f32 %v209, %v217
    %v219 = vadd.f32 %v218, 1.1283791
    %v220 = vmul.f32 %v126, %v219
    %v221 = vmul.f32 %v209, 3.8918573e-05
    %v222 = vadd.f32 %v221, 0.001143296
    %v223 = vmul.f32 %v209, %v222
    %v224 = vadd.f32 %v223, 0.014752088
    %v225 = vmul.f32 %v209, %v224
    %v226 = vadd.f32 %v225, 0.112945676
    %v227 = vmul.f32 %v209, %v226
    %v228 = vadd.f32 %v227, 0.4994258
    %v229 = vmul.f32 %v209, %v228
    %v230 = vadd.f32 %v229, 1.0
    %v231 = vrcp.pop %v230
    %v232 = vmul.f32 %v230, %v231
    %v233 = vsub.f32 1.0, %v232
    %v234 = vmul.f32 %v231, %v233
    %v235 = vadd.f32 %v231, %v234
    %vm236 = vweird.f32 %v230
    %vm237 = vweird.f32 %v231
    %vm238 = vmor %vm236, %vm237
    %v239 = vsel %vm238, %v231, %v235
    %v240 = vand.u32 2147483647, %v230
    %vm241 = vcmp.eq.f32.partialorder %v240, 8.507059e+37
    %v242 = vand.u32 %v230, 2147483648
    %v243 = vor.u32 1.1754944e-38, %v242
    %v244 = vsel %vm241, %v243, %v239
    %v245 = vmul.f32 %v220, %v244
    %v246 = vmin.f32 %v245, 1.0
    %v247 = vmax.f32 %v246, -1.0
    %v248 = vmul.f32 %v127, %v127
    %v249 = vmin.f32 16.0, %v248
    %v250 = vmul.f32 %v249, 2.1237322e-06
    %v251 = vadd.f32 %v250, 0.00028619796
    %v252 = vmul.f32 %v249, %v251
    %v253 = vadd.f32 %v252, 0.0036580483
    %v254 = vmul.f32 %v249, %v253
    %v255 = vadd.f32 %v254, 0.05243302
    %v256 = vmul.f32 %v249, %v255
    %v257 = vadd.f32 %v256, 0.18741608
    %v258 = vmul.f32 %v249, %v257
    %v259 = vadd.f32 %v258, 1.1283791
    %v260 = vmul.f32 %v127, %v259
    %v261 = vmul.f32 %v249, 3.8918573e-05
    %v262 = vadd.f32 %v261, 0.001143296
    %v263 = vmul.f32 %v249, %v262
    %v264 = vadd.f32 %v263, 0.014752088
    %v265 = vmul.f32 %v249, %v264
    %v266 = vadd.f32 %v265, 0.112945676
    %v267 = vmul.f32 %v249, %v266
    %v268 = vadd.f32 %v267, 0.4994258
    %v269 = vmul.f32 %v249, %v268
    %v270 = vadd.f32 %v269, 1.0
    %v271 = vrcp.pop %v270
    %v272 = vmul.f32 %v270, %v271
    %v273 = vsub.f32 1.0, %v272
    %v274 = vmul.f32 %v271, %v273
    %v275 = vadd.f32 %v271, %v274
    %vm276 = vweird.f32 %v270
    %vm277 = vweird.f32 %v271
    %vm278 = vmor %vm276, %vm277
    %v279 = vsel %vm278, %v271, %v275
    %v280 = vand.u32 2147483647, %v270
    %vm281 = vcmp.eq.f32.partialorder %v280, 8.507059e+37
    %v282 = vand.u32 %v270, 2147483648
    %v283 = vor.u32 1.1754944e-38, %v282
    %v284 = vsel %vm281, %v283, %v279
    %v285 = vmul.f32 %v260, %v284
    %v286 = vmin.f32 %v285, 1.0
    %v287 = vmax.f32 %v286, -1.0
    %v288 = vadd.f32 %v167, 1.0
    %v289 = vadd.f32 %v207, 1.0
    %v290 = vadd.f32 %v247, 1.0
    %v291 = vadd.f32 %v287, 1.0
    %v292 = vmul.f32 %v120, %v288
    %v293 = vmul.f32 %v121, %v289
    %v294 = vmul.f32 %v122, %v290
    %v295 = vmul.f32 %v123, %v291
    %v296 = vld [vmem:[%s5] sm:$0xff]
    %v297 = vld [vmem:[%s5 + $0x8] sm:$0xff]
    %v298 = vld [vmem:[%s6] sm:$0xff]
    %v299 = vld [vmem:[%s6 + $0x8] sm:$0xff]
    %301 = vset.pattern.permute.xlu0 0
    %302 = vperm.xlu0 %301, %v298
    %v303 = vpop.permute.xlu0 %302
    %306 = vset.pattern.permute.xlu0 0
    %307 = vperm.xlu0 %306, %v299
    %v308 = vpop.permute.xlu0 %307
    %vm310 = vcmask 261120
    %v312 = vsel %vm310, %v296, 0
    %v315 = vsel %vm310, %v297, 0
    %317 = vmatpush.msra.mxu0 0.0
    %318 = vmatpush.msra.mxu0 0.0
    %319 = vmatpush.msra.mxu0 0.0
    %320 = vmatpush.msra.mxu0 0.0
    %321 = vmatpush.msra.mxu0 0.0
    %322 = vmatpush.msra.mxu0 0.0
    %323 = vmatpush.msra.mxu0 0.0
    %324 = vmatpush.msra.mxu0 0.0
    %325 = vmatpush.msra.mxu0 0.0
    %326 = vmatpush.msra.mxu0 0.0
    %327 = vmatpush.msra.mxu0 0.0
    %328 = vmatpush.msra.mxu0 0.0
    %329 = vmatpush.msra.mxu0 %v295
    %330 = vmatpush.msra.mxu0 %v294
    %331 = vmatpush.msra.mxu0 %v293
    %332 = vmatpush.msra.mxu0 %v292
    %333 = vmatmul.f32.gmra.mxu0 %v312
    %v334 = vpop.f32.mrf.mxu0
    %v335 = vadd.f32 %v303, %v334
    %336 = vmatmul.f32.gmra.mxu0 %v315
    %v337 = vpop.f32.mrf.mxu0
    %v338 = vadd.f32 %v308, %v337
    %339 = vdwg.mxu0
    %v340 = vmul.f32 %v335, 0.5
    %v341 = vmul.f32 %v338, 0.5
    %v342 = vmul.f32 %v335, 0.70710677
    %v343 = vmul.f32 %v338, 0.70710677
    %v344 = vmul.f32 %v342, %v342
    %v345 = vmin.f32 16.0, %v344
    %v346 = vmul.f32 %v345, 2.1237322e-06
    %v347 = vadd.f32 %v346, 0.00028619796
    %v348 = vmul.f32 %v345, %v347
    %v349 = vadd.f32 %v348, 0.0036580483
    %v350 = vmul.f32 %v345, %v349
    %v351 = vadd.f32 %v350, 0.05243302
    %v352 = vmul.f32 %v345, %v351
    %v353 = vadd.f32 %v352, 0.18741608
    %v354 = vmul.f32 %v345, %v353
    %v355 = vadd.f32 %v354, 1.1283791
    %v356 = vmul.f32 %v342, %v355
    %v357 = vmul.f32 %v345, 3.8918573e-05
    %v358 = vadd.f32 %v357, 0.001143296
    %v359 = vmul.f32 %v345, %v358
    %v360 = vadd.f32 %v359, 0.014752088
    %v361 = vmul.f32 %v345, %v360
    %v362 = vadd.f32 %v361, 0.112945676
    %v363 = vmul.f32 %v345, %v362
    %v364 = vadd.f32 %v363, 0.4994258
    %v365 = vmul.f32 %v345, %v364
    %v366 = vadd.f32 %v365, 1.0
    %v367 = vrcp.pop %v366
    %v368 = vmul.f32 %v366, %v367
    %v369 = vsub.f32 1.0, %v368
    %v370 = vmul.f32 %v367, %v369
    %v371 = vadd.f32 %v367, %v370
    %vm372 = vweird.f32 %v366
    %vm373 = vweird.f32 %v367
    %vm374 = vmor %vm372, %vm373
    %v375 = vsel %vm374, %v367, %v371
    %v376 = vand.u32 2147483647, %v366
    %vm377 = vcmp.eq.f32.partialorder %v376, 8.507059e+37
    %v378 = vand.u32 %v366, 2147483648
    %v379 = vor.u32 1.1754944e-38, %v378
    %v380 = vsel %vm377, %v379, %v375
    %v381 = vmul.f32 %v356, %v380
    %v382 = vmin.f32 %v381, 1.0
    %v383 = vmax.f32 %v382, -1.0
    %v384 = vmul.f32 %v343, %v343
    %v385 = vmin.f32 16.0, %v384
    %v386 = vmul.f32 %v385, 2.1237322e-06
    %v387 = vadd.f32 %v386, 0.00028619796
    %v388 = vmul.f32 %v385, %v387
    %v389 = vadd.f32 %v388, 0.0036580483
    %v390 = vmul.f32 %v385, %v389
    %v391 = vadd.f32 %v390, 0.05243302
    %v392 = vmul.f32 %v385, %v391
    %v393 = vadd.f32 %v392, 0.18741608
    %v394 = vmul.f32 %v385, %v393
    %v395 = vadd.f32 %v394, 1.1283791
    %v396 = vmul.f32 %v343, %v395
    %v397 = vmul.f32 %v385, 3.8918573e-05
    %v398 = vadd.f32 %v397, 0.001143296
    %v399 = vmul.f32 %v385, %v398
    %v400 = vadd.f32 %v399, 0.014752088
    %v401 = vmul.f32 %v385, %v400
    %v402 = vadd.f32 %v401, 0.112945676
    %v403 = vmul.f32 %v385, %v402
    %v404 = vadd.f32 %v403, 0.4994258
    %v405 = vmul.f32 %v385, %v404
    %v406 = vadd.f32 %v405, 1.0
    %v407 = vrcp.pop %v406
    %v408 = vmul.f32 %v406, %v407
    %v409 = vsub.f32 1.0, %v408
    %v410 = vmul.f32 %v407, %v409
    %v411 = vadd.f32 %v407, %v410
    %vm412 = vweird.f32 %v406
    %vm413 = vweird.f32 %v407
    %vm414 = vmor %vm412, %vm413
    %v415 = vsel %vm414, %v407, %v411
    %v416 = vand.u32 2147483647, %v406
    %vm417 = vcmp.eq.f32.partialorder %v416, 8.507059e+37
    %v418 = vand.u32 %v406, 2147483648
    %v419 = vor.u32 1.1754944e-38, %v418
    %v420 = vsel %vm417, %v419, %v415
    %v421 = vmul.f32 %v396, %v420
    %v422 = vmin.f32 %v421, 1.0
    %v423 = vmax.f32 %v422, -1.0
    %v424 = vadd.f32 %v383, 1.0
    %v425 = vadd.f32 %v423, 1.0
    %v426 = vmul.f32 %v340, %v424
    %v427 = vmul.f32 %v341, %v425
    %v428 = vld [vmem:[%s7] sm:$0xff]
    %v429 = vld [vmem:[%s7 + $0x8] sm:$0xff]
    %v430 = vld [vmem:[%s8] sm:$0xff]
    %v431 = vld [vmem:[%s8 + $0x8] sm:$0xff]
    %433 = vset.pattern.permute.xlu0 0
    %434 = vperm.xlu0 %433, %v430
    %v435 = vpop.permute.xlu0 %434
    %438 = vset.pattern.permute.xlu0 0
    %439 = vperm.xlu0 %438, %v431
    %v440 = vpop.permute.xlu0 %439
    %v443 = vsel %vm78, %v428, 0
    %v446 = vsel %vm78, %v429, 0
    %448 = vmatpush.msra.mxu0 0.0
    %449 = vmatpush.msra.mxu0 0.0
    %450 = vmatpush.msra.mxu0 0.0
    %451 = vmatpush.msra.mxu0 0.0
    %452 = vmatpush.msra.mxu0 0.0
    %453 = vmatpush.msra.mxu0 0.0
    %454 = vmatpush.msra.mxu0 0.0
    %455 = vmatpush.msra.mxu0 0.0
    %456 = vmatpush.msra.mxu0 0.0
    %457 = vmatpush.msra.mxu0 0.0
    %458 = vmatpush.msra.mxu0 0.0
    %459 = vmatpush.msra.mxu0 0.0
    %460 = vmatpush.msra.mxu0 0.0
    %461 = vmatpush.msra.mxu0 0.0
    %462 = vmatpush.msra.mxu0 %v427
    %463 = vmatpush.msra.mxu0 %v426
    %464 = vmatmul.f32.gmra.mxu0 %v443
    %v465 = vpop.f32.mrf.mxu0
    %v466 = vadd.f32 %v435, %v465
    %467 = vmatmul.f32.gmra.mxu0 %v446
    %v468 = vpop.f32.mrf.mxu0
    %v469 = vadd.f32 %v440, %v468
    %470 = vdwg.mxu0
    %471 = vst [vmem:[#allocation3] sm:$0xff] %v466
    %472 = vst [vmem:[#allocation3 + $0x8] sm:$0xff] %v469
    // Predicated region
    $region38: #{tpu_custom_call.1} parent=1 // pred_check
      _
    $region39: #{tpu_custom_call.1} parent=1 // pred_check_branch
      %474 = sbr.rel (0) target = $region41
    $region40: #{tpu_custom_call.1} parent=1 // pred_region
      %476 = vsyncadd [#allocation4], 0
      %s477 = sshll.u32 [#allocation3], 4
      %s478 = int_to_ptr.vmem [resolvable:$true] %s477
      %s479 = sshll.u32 %s9, 4
      %s480 = int_to_ptr.hbm [resolvable:$true] %s479
      %485 = dma.vmem_to_hbm [thread:$0]  %s478, 256, %s480, [#allocation4], 128, 128, 8
    $region41: #{tpu_custom_call.1} parent=1 // pred_fallthru
      _
    // Predicated region
    $region42: #{tpu_custom_call.1} parent=1 // pred_check
      _
    $region43: #{tpu_custom_call.1} parent=1 // pred_check_branch
      %487 = sbr.rel (0) target = $region45
    $region44: #{tpu_custom_call.1} parent=1 // pred_region
      %489 = dma.done [#allocation4], 256
    $region45: #{tpu_custom_call.1} parent=1 // pred_fallthru
      _
    %490 = vsyncpa [#allocation4], 1

</llo_original>
